<compile_context>
chip_gen: v5e
topology: v5e:2x2
jax: 0.10.0
libtpu: 0.0.40
codegen_flags: <defaults>
</compile_context>

<pallas_src>
import jax
import jax.numpy as jnp
from jax.experimental import pallas as pl
from jax.experimental.pallas import tpu as pltpu

EPS = 1e-5
LANE = 128


def _round_up(v, m):
    return (v + m - 1) // m * m


def _pad_cols(a, total_cols):
    pad = total_cols - a.shape[-1]
    if pad == 0:
        return a
    return jnp.pad(a, ((0, 0), (0, pad)))


def _block_diag(w):
    """(H, fi, fo) -> (H*fi, H*fo) block-diagonal matrix."""
    H, fi, fo = w.shape
    eye = jnp.eye(H, dtype=w.dtype)
    return jnp.einsum("hio,hg->higo", w, eye).reshape(H * fi, H * fo)


# ---------------------------------------------------------------------------
# Fused kernel: the whole GroupMLP for one N-tile, all heads at once.
# Every layer is a single lane-dense matmul (block-diagonal weights), so there is
# no per-head slicing or concatenation inside the kernel.
#
# Ref layout (positional):
#   n_layers == 1 : x, w0_pad, b0_pad, out
#   n_layers >= 2 : x, w0_flat, shift0,
#                   [w_mid_bd, shift_mid] * (n_layers - 2),
#                   w_last_bd_pad, b_last_pad, out
# Shapes seen per N-tile of size Tn:
#   x:            (Tn, Fin)
#   w0_flat:      (Fin, H*hidden)            shift*: (1, H*hidden)  [f32]
#   w_mid_bd:     (H*hidden, H*hidden)
#   w_last_bd:    (H*hidden, out_pad)        b_last: (1, out_pad)   [f32]
#   out:          (Tn, out_pad)              out_pad = round_up(H*out_feats, 128)
# ---------------------------------------------------------------------------
def _make_fused_kernel(n_layers):
    def kernel(*refs):
        x_ref, out_ref = refs[0], refs[-1]
        x = x_ref[...]

        if n_layers == 1:
            w_ref, b_ref = refs[1], refs[2]
            o = jnp.dot(x, w_ref[...], preferred_element_type=jnp.float32)
            out_ref[...] = (o + b_ref[...]).astype(out_ref.dtype)
            return

        # Layer 0: one dense lane-dense matmul over all heads (x is shared by heads).
        # BN scale already folded into the weight columns; epilogue is add + relu.
        w_ref, t_ref = refs[1], refs[2]
        h = jnp.dot(x, w_ref[...], preferred_element_type=jnp.float32)
        h = jnp.maximum(h + t_ref[...], 0.0)                    # (Tn, H*hidden), f32

        idx = 3
        # Middle layers: block-diagonal weights -> one matmul per layer.
        for _ in range(n_layers - 2):
            w_ref, t_ref = refs[idx], refs[idx + 1]
            idx += 2
            h = jnp.dot(h.astype(w_ref.dtype), w_ref[...],
                        preferred_element_type=jnp.float32)
            h = jnp.maximum(h + t_ref[...], 0.0)

        # Last layer: block-diagonal weights, lane-padded output slab.
        w_ref, b_ref = refs[idx], refs[idx + 1]
        o = jnp.dot(h.astype(w_ref.dtype), w_ref[...],
                    preferred_element_type=jnp.float32) + b_ref[...]
        out_ref[...] = o.astype(out_ref.dtype)

    return kernel


# ---------------------------------------------------------------------------
# Parameter construction (deterministic, shapes match the PyTorch module).
# ---------------------------------------------------------------------------
def init_group_mlp_params(key, in_feats, hidden, out_feats, n_heads, n_layers):
    if n_layers == 1:
        dims = [(in_feats, out_feats)]
    else:
        dims = [(in_feats, hidden)]
        dims += [(hidden, hidden)] * (n_layers - 2)
        dims += [(hidden, out_feats)]

    weights, biases, bn = [], [], []
    for li, (fi, fo) in enumerate(dims):
        key, kw, kb = jax.random.split(key, 3)
        weights.append(jax.random.normal(kw, (n_heads, fi, fo), jnp.float32) * 0.1)
        biases.append(jax.random.normal(kb, (n_heads, 1, fo), jnp.float32) * 0.1)
        if li < n_layers - 1:  # MultiHeadBatchNorm(n_heads, fo * n_heads)
            key, k1, k2, k3, k4 = jax.random.split(key, 5)
            running_mean = jax.random.normal(k1, (n_heads, fo), jnp.float32) * 0.1
            running_var = jax.random.uniform(k2, (n_heads, fo), jnp.float32, 0.5, 1.5)
            gamma = 1.0 + 0.1 * jax.random.normal(k3, (n_heads, fo), jnp.float32)
            beta = 0.1 * jax.random.normal(k4, (n_heads, fo), jnp.float32)
            bn.append((running_mean, running_var, gamma, beta))
    return {"weights": weights, "biases": biases, "bn": bn, "n_heads": n_heads}


# ---------------------------------------------------------------------------
# GroupMLP forward: parameter folding/packing in plain JAX, all compute in ONE kernel.
# ---------------------------------------------------------------------------
def group_mlp_forward(params, x, *, compute_dtype=jnp.float32):
    """x: (N, in_feats) float32  ->  (N, n_heads, out_feats) float32.

    compute_dtype: dtype of the matmul inputs (jnp.float32 or jnp.bfloat16).
    Accumulation and the shift/ReLU epilogue are always float32.
    """
    H = params["n_heads"]
    weights, biases, bn = params["weights"], params["biases"], params["bn"]
    n_layers = len(weights)
    N, Fin = x.shape
    out_feats = weights[-1].shape[-1]

    out_pad = _round_up(H * out_feats, LANE)   # lane-dense, unmasked stores

    # N tiling:
    #  * N < 256: a single full-extent tile.
    #  * N >= 256: at least 2 tiles (both v7x TensorCores busy), growing to 1024-row
    #    tiles for large N (past the measured mem-bound roofline knee).
    if N < 256:
        n_tile = N
    else:
        n_tile = min(1024, _round_up(pl.cdiv(N, 2), 8))
    grid = (pl.cdiv(N, n_tile),)

    row_map = lambda n: (n, 0)
    const2 = lambda n: (0, 0)

    inputs = [x.astype(compute_dtype)]
    in_specs = [pl.BlockSpec((n_tile, Fin), row_map)]

    if n_layers == 1:
        w0_flat = jnp.transpose(weights[0], (1, 0, 2)).reshape(Fin, H * out_feats)
        w0_flat = _pad_cols(w0_flat, out_pad).astype(compute_dtype)
        b0 = _pad_cols(biases[0][:, 0, :].reshape(1, H * out_feats), out_pad)
        inputs += [w0_flat, b0]
        in_specs += [pl.BlockSpec((Fin, out_pad), const2),
                     pl.BlockSpec((1, out_pad), const2)]
    else:
        hidden = weights[0].shape[-1]

        def folded(li):
            # Eval-BN folded: scale into weight columns, bias+mean+beta into shift.
            rm, rv, g, be = bn[li]
            inv = g * jax.lax.rsqrt(rv + EPS)                     # (H, hidden)
            w = weights[li] * inv[:, None, :]                     # per-out-col scale
            shift = (biases[li][:, 0, :] - rm) * inv + be         # (H, hidden)
            return w, shift.reshape(1, H * hidden)

        # Layer 0: dense packing over heads (x is shared), (Fin, H*hidden).
        w0, shift0 = folded(0)
        w0_flat = jnp.transpose(w0, (1, 0, 2)).reshape(Fin, H * hidden)
        inputs += [w0_flat.astype(compute_dtype), shift0]
        in_specs += [pl.BlockSpec((Fin, H * hidden), const2),
                     pl.BlockSpec((1, H * hidden), const2)]

        # Middle layers: block-diagonal weights -> one lane-dense matmul each.
        for li in range(1, n_layers - 1):
            w, shift = folded(li)
            w_bd = _block_diag(w)                                 # (H*hid, H*hid)
            inputs += [w_bd.astype(compute_dtype), shift]
            in_specs += [pl.BlockSpec((H * hidden, H * hidden), const2),
                         pl.BlockSpec((1, H * hidden), const2)]

        # Last layer: block-diagonal, output columns zero-padded to 128-lane multiple.
        w_last = _pad_cols(_block_diag(weights[-1]), out_pad).astype(compute_dtype)
        b_last = _pad_cols(biases[-1][:, 0, :].reshape(1, H * out_feats), out_pad)
        inputs += [w_last, b_last]
        in_specs += [pl.BlockSpec((H * hidden, out_pad), const2),
                     pl.BlockSpec((1, out_pad), const2)]

    out_spec = pl.BlockSpec((n_tile, out_pad), row_map)
    out_shape = jax.ShapeDtypeStruct((N, out_pad), jnp.float32)

    # Explicit VMEM budget: double-buffered x/out tiles + resident weights + headroom.
    itemsize = jnp.dtype(compute_dtype).itemsize
    stream_bytes = 2 * (n_tile * Fin * itemsize + n_tile * out_pad * 4)
    weight_bytes = 2 * sum(int(a.size) * a.dtype.itemsize for a in inputs[1:])
    vmem_limit = int(min(64 * 1024 * 1024,
                         max(stream_bytes + weight_bytes + (8 << 20),
                             32 * 1024 * 1024)))

    out_flat = pl.pallas_call(
        _make_fused_kernel(n_layers),
        grid=grid,
        in_specs=in_specs,
        out_specs=out_spec,
        out_shape=out_shape,
        compiler_params=pltpu.CompilerParams(
            dimension_semantics=("parallel",),
            vmem_limit_bytes=vmem_limit,
        ),
    )(*inputs)

    # Drop lane padding + free minor-dim split: (N, out_pad) -> (N, H, out_feats).
    return out_flat[:, :H * out_feats].reshape(N, H, out_feats)


# ---------------------------------------------------------------------------
# Pure-JAX reference with identical math, for correctness checking.
# ---------------------------------------------------------------------------
def group_mlp_reference(params, x):
    n_heads = params["n_heads"]
    n_layers = len(params["weights"])
    N, F = x.shape
    cur = jnp.broadcast_to(x[None, :, :], (n_heads, N, F))
    for li in range(n_layers):
        w, b = params["weights"][li], params["biases"][li]
        cur = jnp.einsum("hnf,hfo->hno", cur, w) + b
        if li < n_layers - 1:
            rm, rv, gamma, beta = params["bn"][li]
            cur = (cur - rm[:, None, :]) * jax.lax.rsqrt(rv[:, None, :] + EPS)
            cur = cur * gamma[:, None, :] + beta[:, None, :]
            cur = jnp.maximum(cur, 0.0)
    return jnp.transpose(cur, (1, 0, 2))


if __name__ == "__main__":
    key = jax.random.PRNGKey(0)

    # Test 1: default small shapes (n_layers=2), f32, single N-tile.
    N, in_feats, hidden, out_feats, n_heads, n_layers = 8, 32, 32, 16, 4, 2
    key, kparams, kx = jax.random.split(key, 3)
    params = init_group_mlp_params(kparams, in_feats, hidden, out_feats, n_heads, n_layers)
    x = jax.random.normal(kx, (N, in_feats), jnp.float32)

    out = jax.block_until_ready(group_mlp_forward(params, x))
    ref = group_mlp_reference(params, x)
    assert out.shape == (N, n_heads, out_feats), out.shape
    assert jnp.allclose(out, ref, atol=1e-4, rtol=1e-4), float(jnp.max(jnp.abs(out - ref)))

    # Test 2: 3 layers, >= 2 N-tiles (both v7x TCs get work), f32.
    N2, in2, hid2, out2, H2, L2 = 2048, 64, 64, 32, 2, 3
    key, kp2, kx2 = jax.random.split(key, 3)
    params2 = init_group_mlp_params(kp2, in2, hid2, out2, H2, L2)
    x2 = jax.random.normal(kx2, (N2, in2), jnp.float32)

    out2_v = jax.block_until_ready(group_mlp_forward(params2, x2))
    ref2 = group_mlp_reference(params2, x2)
    assert out2_v.shape == (N2, H2, out2), out2_v.shape
    assert jnp.allclose(out2_v, ref2, atol=1e-3, rtol=1e-3), float(jnp.max(jnp.abs(out2_v - ref2)))

    # Test 3: bf16 matmul inputs with f32 accumulation/epilogue (looser tolerance).
    out3 = jax.block_until_ready(
        group_mlp_forward(params2, x2, compute_dtype=jnp.bfloat16))
    assert out3.shape == (N2, H2, out2), out3.shape
    assert bool(jnp.all(jnp.isfinite(out3)))
    assert jnp.allclose(out3, ref2, atol=1e-1, rtol=5e-2), float(jnp.max(jnp.abs(out3 - ref2)))

    print("KERNEL_OK")
</pallas_src>

<mosaic_0001>
module attributes {stable_mosaic.version = 11 : i64} {
  func.func @kernel(%arg0: i32, %arg1: memref<8x32xf32, #tpu.memory_space<vmem>>, %arg2: memref<32x128xf32, #tpu.memory_space<vmem>>, %arg3: memref<1x128xf32, #tpu.memory_space<vmem>>, %arg4: memref<128x128xf32, #tpu.memory_space<vmem>>, %arg5: memref<1x128xf32, #tpu.memory_space<vmem>>, %arg6: memref<8x128xf32, #tpu.memory_space<vmem>>) attributes {dimension_semantics = [#tpu.dimension_semantics<parallel>], iteration_bounds = array<i64: 1>, scalar_prefetch = 0 : i64, scratch_operands = 0 : i64, tpu.core_type = #tpu.core_type<tc>, window_params = [{transform_indices = @transform_0, window_bounds = array<i64: 8, 32>}, {pipeline_mode = #tpu.pipeline_mode<synchronous>, transform_indices = @transform_1, window_bounds = array<i64: 32, 128>}, {pipeline_mode = #tpu.pipeline_mode<synchronous>, transform_indices = @transform_2, window_bounds = array<i64: 1, 128>}, {pipeline_mode = #tpu.pipeline_mode<synchronous>, transform_indices = @transform_3, window_bounds = array<i64: 128, 128>}, {pipeline_mode = #tpu.pipeline_mode<synchronous>, transform_indices = @transform_4, window_bounds = array<i64: 1, 128>}, {transform_indices = @transform_5, window_bounds = array<i64: 8, 128>}]} {
    %c0 = arith.constant 0 : index
    %c0_0 = arith.constant 0 : index
    %0 = vector.load %arg1[%c0, %c0_0] : memref<8x32xf32, #tpu.memory_space<vmem>>, vector<8x32xf32>
    %c0_1 = arith.constant 0 : index
    %c0_2 = arith.constant 0 : index
    %1 = vector.load %arg2[%c0_1, %c0_2] : memref<32x128xf32, #tpu.memory_space<vmem>>, vector<32x128xf32>
    %cst = arith.constant dense<0.000000e+00> : vector<8x128xf32>
    %2 = tpu.matmul %0, %1, %cst {dimension_numbers = #tpu.dot_dimension_numbers<[1], [0], [0], [1], [0, 0, 1, 1], [], []>} : vector<8x32xf32>, vector<32x128xf32>, vector<8x128xf32> -> vector<8x128xf32>
    %c0_3 = arith.constant 0 : index
    %c0_4 = arith.constant 0 : index
    %3 = vector.load %arg3[%c0_3, %c0_4] : memref<1x128xf32, #tpu.memory_space<vmem>>, vector<1x128xf32>
    %4 = vector.broadcast %3 : vector<1x128xf32> to vector<8x128xf32>
    %5 = arith.addf %2, %4 : vector<8x128xf32>
    %cst_5 = arith.constant 0.000000e+00 : f32
    %6 = vector.broadcast %cst_5 : f32 to vector<8x128xf32>
    %7 = arith.maximumf %5, %6 : vector<8x128xf32>
    %c0_6 = arith.constant 0 : index
    %c0_7 = arith.constant 0 : index
    %8 = vector.load %arg4[%c0_6, %c0_7] : memref<128x128xf32, #tpu.memory_space<vmem>>, vector<128x128xf32>
    %cst_8 = arith.constant dense<0.000000e+00> : vector<8x128xf32>
    %9 = tpu.matmul %7, %8, %cst_8 {dimension_numbers = #tpu.dot_dimension_numbers<[1], [0], [0], [1], [0, 0, 1, 1], [], []>} : vector<8x128xf32>, vector<128x128xf32>, vector<8x128xf32> -> vector<8x128xf32>
    %c0_9 = arith.constant 0 : index
    %c0_10 = arith.constant 0 : index
    %10 = vector.load %arg5[%c0_9, %c0_10] : memref<1x128xf32, #tpu.memory_space<vmem>>, vector<1x128xf32>
    %11 = vector.broadcast %10 : vector<1x128xf32> to vector<8x128xf32>
    %12 = arith.addf %9, %11 : vector<8x128xf32>
    %c0_11 = arith.constant 0 : index
    %c0_12 = arith.constant 0 : index
    %13 = vector.load %arg6[%c0_11, %c0_12] : memref<8x128xf32, #tpu.memory_space<vmem>>, vector<8x128xf32>
    tpu.vector_store %arg6[%c0_11, %c0_12], %12 {strides = array<i32>} : memref<8x128xf32, #tpu.memory_space<vmem>>, vector<8x128xf32>,
    return
  }
  func.func @transform_0(%arg0: i32) -> (i32, i32) {
    %c0_i32 = arith.constant 0 : i32
    %c0_i32_0 = arith.constant 0 : i32
    return %arg0, %c0_i32 : i32, i32
  }
  func.func @transform_1(%arg0: i32) -> (i32, i32) {
    %c0_i32 = arith.constant 0 : i32
    %c0_i32_0 = arith.constant 0 : i32
    %c0_i32_1 = arith.constant 0 : i32
    return %c0_i32, %c0_i32_0 : i32, i32
  }
  func.func @transform_2(%arg0: i32) -> (i32, i32) {
    %c0_i32 = arith.constant 0 : i32
    %c0_i32_0 = arith.constant 0 : i32
    %c0_i32_1 = arith.constant 0 : i32
    return %c0_i32, %c0_i32_0 : i32, i32
  }
  func.func @transform_3(%arg0: i32) -> (i32, i32) {
    %c0_i32 = arith.constant 0 : i32
    %c0_i32_0 = arith.constant 0 : i32
    %c0_i32_1 = arith.constant 0 : i32
    return %c0_i32, %c0_i32_0 : i32, i32
  }
  func.func @transform_4(%arg0: i32) -> (i32, i32) {
    %c0_i32 = arith.constant 0 : i32
    %c0_i32_0 = arith.constant 0 : i32
    %c0_i32_1 = arith.constant 0 : i32
    return %c0_i32, %c0_i32_0 : i32, i32
  }
  func.func @transform_5(%arg0: i32) -> (i32, i32) {
    %c0_i32 = arith.constant 0 : i32
    %c0_i32_0 = arith.constant 0 : i32
    return %arg0, %c0_i32 : i32, i32
  }
}

</mosaic_0001>

<llo_original>
// kernel: tpu_custom_call.1
$region0: #{tpu_custom_call.1}
  #allocation0 [shape = 'u32[]', space=smem, size = 0x4, offset = 0x4, fixed_abs, tag = 'smem constant byte address 0x4 - core index']
  #allocation1 [shape = 'u32[72,128]{1,0:T(1,128)}', space=vmem, size = 0x9000, scoped, tag = 'internal scratch']
  %s0 = inlined_call_operand.hbm [shape: f32[8,32], index: 0, kind: input, shape index: {}]
  %s1 = inlined_call_operand.hbm [shape: f32[32,128], index: 1, kind: input, shape index: {}]
  %s2 = inlined_call_operand.vmem [shape: f32[1,128], index: 2, kind: input, shape index: {}]
  %s3 = inlined_call_operand.hbm [shape: f32[128,128], index: 3, kind: input, shape index: {}]
  %s4 = inlined_call_operand.vmem [shape: f32[1,128], index: 4, kind: input, shape index: {}]
  %s5 = inlined_call_operand.hbm [shape: f32[8,128], index: 5, kind: output, shape index: {}]
  %s6 = sld [smem:[#allocation0]]
  $region42: #{tpu_custom_call.1} parent=0
    _
  %s8 = ssub.s32 1, %s6
  %s9 = scalar_select 0, %s8, %s6
  $region1: #{tpu_custom_call.1} parent=0
    #allocation2 [shape = 'u8[4096]{0}', space=vmem, size = 0x1000, scoped, tag = 'input window, operand 0, single buffered']
    #allocation3 [shape = 's32[1]{0}', space=sflag, size = 0x4, scoped, tag = 'scoped memory for tpu_custom_call.1']
    #allocation4 [shape = 's32[1]{0}', space=sflag, size = 0x4, scoped, tag = 'scoped memory for tpu_custom_call.1']
    #allocation5 [shape = 'u8[16384]{0}', space=vmem, size = 0x4000, scoped, tag = 'input window, operand 1, single buffered']
    #allocation6 [shape = 's32[1]{0}', space=sflag, size = 0x4, scoped, tag = 'scoped memory for tpu_custom_call.1']
    #allocation7 [shape = 'u8[65536]{0}', space=vmem, size = 0x10000, scoped, tag = 'input window, operand 3, single buffered']
    #allocation8 [shape = 'u8[4096]{0}', space=vmem, size = 0x1000, scoped, tag = 'output window, operand 0, single buffered']
    %10 = vsyncpa [#allocation3], 0
    %11 = vsyncpa [#allocation6], 0
    %12 = vsyncpa [#allocation4], 0
    // Predicated region
    $region2: #{tpu_custom_call.1} parent=1 // pred_check
      _
    $region3: #{tpu_custom_call.1} parent=1 // pred_check_branch
      %14 = sbr.rel (0) target = $region5
    $region4: #{tpu_custom_call.1} parent=1 // pred_region
      %16 = vsyncadd [#allocation3], 0
      %s18 = sshll.u32 %s0, 4
      %s19 = int_to_ptr.hbm [resolvable:$true] %s18
      %s20 = sshll.u32 [#allocation2], 4
      %s21 = int_to_ptr.vmem [resolvable:$true] %s20
      %23 = dma.hbm_to_vmem [thread:$0]  %s19, 128, %s21, [#allocation3]
    $region5: #{tpu_custom_call.1} parent=1 // pred_fallthru
      _
    // Predicated region
    $region6: #{tpu_custom_call.1} parent=1 // pred_check
      _
    $region7: #{tpu_custom_call.1} parent=1 // pred_check_branch
      %25 = sbr.rel (0) target = $region9
    $region8: #{tpu_custom_call.1} parent=1 // pred_region
      %27 = vsyncadd [#allocation6], 0
      %s28 = sshll.u32 %s1, 4
      %s29 = int_to_ptr.hbm [resolvable:$true] %s28
      %s30 = sshll.u32 [#allocation5], 4
      %s31 = int_to_ptr.vmem [resolvable:$true] %s30
      %36 = dma.hbm_to_vmem [thread:$0]  %s29, 512, %s31, [#allocation6], 128, 128, 8
    $region9: #{tpu_custom_call.1} parent=1 // pred_fallthru
      _
    // Predicated region
    $region10: #{tpu_custom_call.1} parent=1 // pred_check
      _
    $region11: #{tpu_custom_call.1} parent=1 // pred_check_branch
      %38 = sbr.rel (0) target = $region13
    $region12: #{tpu_custom_call.1} parent=1 // pred_region
      _
    $region13: #{tpu_custom_call.1} parent=1 // pred_fallthru
      _
    // Predicated region
    $region14: #{tpu_custom_call.1} parent=1 // pred_check
      _
    $region15: #{tpu_custom_call.1} parent=1 // pred_check_branch
      %40 = sbr.rel (0) target = $region17
    $region16: #{tpu_custom_call.1} parent=1 // pred_region
      %42 = vsyncadd [#allocation6], 0
      %s43 = sshll.u32 %s3, 4
      %s44 = int_to_ptr.hbm [resolvable:$true] %s43
      %s45 = sshll.u32 [#allocation7], 4
      %s46 = int_to_ptr.vmem [resolvable:$true] %s45
      %51 = dma.hbm_to_vmem [thread:$0]  %s44, 2048, %s46, [#allocation6], 128, 128, 8
    $region17: #{tpu_custom_call.1} parent=1 // pred_fallthru
      _
    // Predicated region
    $region18: #{tpu_custom_call.1} parent=1 // pred_check
      _
    $region19: #{tpu_custom_call.1} parent=1 // pred_check_branch
      %53 = sbr.rel (0) target = $region21
    $region20: #{tpu_custom_call.1} parent=1 // pred_region
      _
    $region21: #{tpu_custom_call.1} parent=1 // pred_fallthru
      _
    // Predicated region
    $region22: #{tpu_custom_call.1} parent=1 // pred_check
      _
    $region23: #{tpu_custom_call.1} parent=1 // pred_check_branch
      %55 = sbr.rel (0) target = $region25
    $region24: #{tpu_custom_call.1} parent=1 // pred_region
      %57 = dma.done [#allocation3], 128
    $region25: #{tpu_custom_call.1} parent=1 // pred_fallthru
      _
    // Predicated region
    $region26: #{tpu_custom_call.1} parent=1 // pred_check
      _
    $region27: #{tpu_custom_call.1} parent=1 // pred_check_branch
      %59 = sbr.rel (0) target = $region29
    $region28: #{tpu_custom_call.1} parent=1 // pred_region
      %61 = dma.done [#allocation6], 512
    $region29: #{tpu_custom_call.1} parent=1 // pred_fallthru
      _
    // Predicated region
    $region30: #{tpu_custom_call.1} parent=1 // pred_check
      _
    $region31: #{tpu_custom_call.1} parent=1 // pred_check_branch
      %63 = sbr.rel (0) target = $region33
    $region32: #{tpu_custom_call.1} parent=1 // pred_region
      %65 = dma.done [#allocation6], 2048
    $region33: #{tpu_custom_call.1} parent=1 // pred_fallthru
      _
    %v66 = vld [vmem:[#allocation2] sm:$0xff]
    %v67 = vld [vmem:[#allocation5] sm:$0xff]
    %v68 = vld [vmem:[#allocation5 + $0x8] sm:$0xff]
    %v69 = vld [vmem:[#allocation5 + $0x10] sm:$0xff]
    %v70 = vld [vmem:[#allocation5 + $0x18] sm:$0xff]
    %v71 = vld [vmem:[%s2] sm:$0x1]
    %v73 = vperm.slane %v71, 0
    %vm75 = vcmask 261120
    %v77 = vsel %vm75, %v66, 0
    %79 = vmatpush.msra.mxu0 0.0
    %80 = vmatpush.msra.mxu0 0.0
    %81 = vmatpush.msra.mxu0 0.0
    %82 = vmatpush.msra.mxu0 0.0
    %83 = vmatpush.msra.mxu0 0.0
    %84 = vmatpush.msra.mxu0 0.0
    %85 = vmatpush.msra.mxu0 0.0
    %86 = vmatpush.msra.mxu0 0.0
    %87 = vmatpush.msra.mxu0 0.0
    %88 = vmatpush.msra.mxu0 0.0
    %89 = vmatpush.msra.mxu0 0.0
    %90 = vmatpush.msra.mxu0 0.0
    %91 = vmatpush.msra.mxu0 %v70
    %92 = vmatpush.msra.mxu0 %v69
    %93 = vmatpush.msra.mxu0 %v68
    %94 = vmatpush.msra.mxu0 %v67
    %95 = vmatmul.f32.gmra.mxu0 %v77
    %v96 = vpop.f32.mrf.mxu0
    %v97 = vadd.f32 %v73, %v96
    %98 = vdwg.mxu0
    %v99 = vmax.f32 %v97, 0.0
    %v100 = vld [vmem:[#allocation7] sm:$0xff]
    %v101 = vld [vmem:[#allocation7 + $0x8] sm:$0xff]
    %v102 = vld [vmem:[#allocation7 + $0x10] sm:$0xff]
    %v103 = vld [vmem:[#allocation7 + $0x18] sm:$0xff]
    %v104 = vld [vmem:[#allocation7 + $0x20] sm:$0xff]
    %v105 = vld [vmem:[#allocation7 + $0x28] sm:$0xff]
    %v106 = vld [vmem:[#allocation7 + $0x30] sm:$0xff]
    %v107 = vld [vmem:[#allocation7 + $0x38] sm:$0xff]
    %v108 = vld [vmem:[#allocation7 + $0x40] sm:$0xff]
    %v109 = vld [vmem:[#allocation7 + $0x48] sm:$0xff]
    %v110 = vld [vmem:[#allocation7 + $0x50] sm:$0xff]
    %v111 = vld [vmem:[#allocation7 + $0x58] sm:$0xff]
    %v112 = vld [vmem:[#allocation7 + $0x60] sm:$0xff]
    %v113 = vld [vmem:[#allocation7 + $0x68] sm:$0xff]
    %v114 = vld [vmem:[#allocation7 + $0x70] sm:$0xff]
    %v115 = vld [vmem:[#allocation7 + $0x78] sm:$0xff]
    %v116 = vld [vmem:[%s4] sm:$0x1]
    %v118 = vperm.slane %v116, 0
    %120 = vmatpush.msra.mxu0 %v115
    %121 = vmatpush.msra.mxu0 %v114
    %122 = vmatpush.msra.mxu0 %v113
    %123 = vmatpush.msra.mxu0 %v112
    %124 = vmatpush.msra.mxu0 %v111
    %125 = vmatpush.msra.mxu0 %v110
    %126 = vmatpush.msra.mxu0 %v109
    %127 = vmatpush.msra.mxu0 %v108
    %128 = vmatpush.msra.mxu0 %v107
    %129 = vmatpush.msra.mxu0 %v106
    %130 = vmatpush.msra.mxu0 %v105
    %131 = vmatpush.msra.mxu0 %v104
    %132 = vmatpush.msra.mxu0 %v103
    %133 = vmatpush.msra.mxu0 %v102
    %134 = vmatpush.msra.mxu0 %v101
    %135 = vmatpush.msra.mxu0 %v100
    %136 = vmatmul.f32.gmra.mxu0 %v99
    %v137 = vpop.f32.mrf.mxu0
    %v138 = vadd.f32 %v118, %v137
    %139 = vdwg.mxu0
    %140 = vst [vmem:[#allocation8] sm:$0xff] %v138
    // Predicated region
    $region34: #{tpu_custom_call.1} parent=1 // pred_check
      _
    $region35: #{tpu_custom_call.1} parent=1 // pred_check_branch
      %142 = sbr.rel (0) target = $region37
    $region36: #{tpu_custom_call.1} parent=1 // pred_region
      %144 = vsyncadd [#allocation4], 0
      %s146 = sshll.u32 [#allocation8], 4
      %s147 = int_to_ptr.vmem [resolvable:$true] %s146
      %s148 = sshll.u32 %s5, 4
      %s149 = int_to_ptr.hbm [resolvable:$true] %s148
      %151 = dma.vmem_to_hbm [thread:$0]  %s147, 128, %s149, [#allocation4]
    $region37: #{tpu_custom_call.1} parent=1 // pred_fallthru
      _
    // Predicated region
    $region38: #{tpu_custom_call.1} parent=1 // pred_check
      _
    $region39: #{tpu_custom_call.1} parent=1 // pred_check_branch
      %153 = sbr.rel (0) target = $region41
    $region40: #{tpu_custom_call.1} parent=1 // pred_region
      %155 = dma.done [#allocation4], 128
    $region41: #{tpu_custom_call.1} parent=1 // pred_fallthru
      _
    %156 = vsyncpa [#allocation3], 1
    %157 = vsyncpa [#allocation6], 1
    %158 = vsyncpa [#allocation4], 1

</llo_original>
